<compile_context>
chip_gen: v5e
topology: v5e:2x2
jax: 0.10.0
libtpu: 0.0.40
codegen_flags: <defaults>
</compile_context>

<pallas_src>
import functools

import jax
import jax.numpy as jnp
from jax.experimental import pallas as pl
from jax.experimental.pallas import tpu as pltpu

_LANE = 128
_SUBLANE = 8
_VMEM_TILE_BUDGET = 28 * 1024 * 1024   # what the tb sizing targets
_VMEM_LIMIT = 48 * 1024 * 1024         # compiler limit; safe on v7x (64 MiB/TC)


def _round_up(n, m):
    return ((n + m - 1) // m) * m


def _tower_kernel(x_ref, w1_ref, b1_ref, w2_ref, b2_ref, o_ref):
    # fc1: [tb, in] @ [in, hp] -> f32 accumulate; bias + ReLU in f32.
    x = x_ref[...].astype(w1_ref.dtype)        # in-register cast (no-op for f32)
    h = jnp.dot(x, w1_ref[...], preferred_element_type=jnp.float32)
    h = jnp.maximum(h + b1_ref[...], 0.0)
    # Dropout: module evaluated in eval/inference mode -> identity.
    # TODO(synk): training-mode dropout (pltpu.prng_*) not implemented.
    # fc2: [tb, hp] @ [hp, out] -> f32 accumulate; bias in f32; unpadded store.
    out = jnp.dot(h.astype(w2_ref.dtype), w2_ref[...],
                  preferred_element_type=jnp.float32)
    o_ref[...] = (out + b2_ref[...]).astype(o_ref.dtype)


def prepare_tower_params(w1, b1, w2, b2, *, use_bf16=False):
    """Pad the hidden lane dim to a multiple of 128 and cast ONCE (outside the
    per-call path).  Zero padding is exact: zero bias + ReLU(0)=0 and zero w2
    rows contribute nothing.  The output dim is deliberately left unpadded."""
    hidden = w1.shape[1]
    hp = _round_up(hidden, _LANE)
    mm_dtype = jnp.bfloat16 if use_bf16 else w1.dtype
    w1p = jnp.pad(w1, ((0, 0), (0, hp - hidden))).astype(mm_dtype)
    b1p = jnp.pad(jnp.reshape(b1, (1, -1)),
                  ((0, 0), (0, hp - hidden))).astype(jnp.float32)
    w2p = jnp.pad(w2, ((0, hp - hidden), (0, 0))).astype(mm_dtype)
    b2p = jnp.reshape(b2, (1, -1)).astype(jnp.float32)
    return w1p, b1p, w2p, b2p


def _pick_batch_tile(B, in_size, hp, out_size, x_itemsize, w_itemsize,
                     out_itemsize, block_b):
    # Fixed VMEM: weights/biases are resident (constant index_maps -> single buffer).
    weight_bytes = (in_size * hp + hp * out_size) * w_itemsize + (hp + out_size) * 4
    # Per-batch-row VMEM: double-buffered x + out tiles, the f32 [tb, hp] fc1
    # intermediate, plus headroom for the in-register x cast copy.
    per_row = (2 * in_size * x_itemsize + 2 * out_size * out_itemsize
               + hp * 4 + in_size * 4)
    tb_max = max(_SUBLANE,
                 ((_VMEM_TILE_BUDGET - weight_bytes) // per_row)
                 // _SUBLANE * _SUBLANE)
    tb = min(block_b, tb_max)
    if B > tb:
        return tb
    # Whole batch fits one tile: still split into >=2 grid steps when possible
    # so the "parallel" batch axis can shard across v7x's two TensorCores.
    if B >= 2 * _SUBLANE:
        return _round_up((B + 1) // 2, _SUBLANE)
    return B


@functools.partial(jax.jit, static_argnames=("block_b",))
def tower_forward(x, w1p, b1p, w2p, b2p, *, block_b=2048):
    """x: [B, in];  w1p: [in, hp] (hp = hidden padded to 128);  b1p: [1, hp] f32;
       w2p: [hp, out];  b2p: [1, out] f32   ->   [B, out] in x.dtype."""
    B, in_size = x.shape
    hp = w1p.shape[1]
    out_size = w2p.shape[1]
    out_dtype = x.dtype

    tb = _pick_batch_tile(B, in_size, hp, out_size,
                          jnp.dtype(x.dtype).itemsize,
                          jnp.dtype(w1p.dtype).itemsize,
                          jnp.dtype(out_dtype).itemsize,
                          block_b)
    grid = (pl.cdiv(B, tb),)

    w_itemsize = jnp.dtype(w1p.dtype).itemsize
    cost = pl.CostEstimate(
        flops=2 * B * (in_size * hp + hp * out_size),
        transcendentals=0,
        bytes_accessed=(B * in_size * jnp.dtype(x.dtype).itemsize
                        + (in_size * hp + hp * out_size) * w_itemsize
                        + (hp + out_size) * 4
                        + B * out_size * jnp.dtype(out_dtype).itemsize),
    )

    return pl.pallas_call(
        _tower_kernel,
        out_shape=jax.ShapeDtypeStruct((B, out_size), out_dtype),
        grid=grid,
        in_specs=[
            pl.BlockSpec((tb, in_size), lambda i: (i, 0)),   # x: batch-tiled
            pl.BlockSpec((in_size, hp), lambda i: (0, 0)),   # w1: VMEM-resident
            pl.BlockSpec((1, hp), lambda i: (0, 0)),         # b1: VMEM-resident
            pl.BlockSpec((hp, out_size), lambda i: (0, 0)),  # w2: VMEM-resident
            pl.BlockSpec((1, out_size), lambda i: (0, 0)),   # b2: VMEM-resident
        ],
        out_specs=pl.BlockSpec((tb, out_size), lambda i: (i, 0)),  # unpadded store
        compiler_params=pltpu.CompilerParams(
            dimension_semantics=("parallel",),
            vmem_limit_bytes=_VMEM_LIMIT,
        ),
        cost_estimate=cost,
    )(x, w1p, b1p, w2p, b2p)


def init_tower_params(key, input_size, output_size, hidden_size,
                      dtype=jnp.float32):
    """Deterministic init mimicking nn.Linear's U(-1/sqrt(fan_in), 1/sqrt(fan_in))."""
    k1, k2, k3, k4 = jax.random.split(key, 4)
    bound1 = 1.0 / (input_size ** 0.5)
    bound2 = 1.0 / (hidden_size ** 0.5)
    w1 = jax.random.uniform(k1, (input_size, hidden_size), dtype,
                            minval=-bound1, maxval=bound1)
    b1 = jax.random.uniform(k2, (1, hidden_size), dtype,
                            minval=-bound1, maxval=bound1)
    w2 = jax.random.uniform(k3, (hidden_size, output_size), dtype,
                            minval=-bound2, maxval=bound2)
    b2 = jax.random.uniform(k4, (1, output_size), dtype,
                            minval=-bound2, maxval=bound2)
    return w1, b1, w2, b2


if __name__ == "__main__":
    key = jax.random.PRNGKey(0)
    k_x, k_p = jax.random.split(key)

    batch, input_size, hidden_size, output_size = 8, 32, 64, 4
    x = jax.random.normal(k_x, (batch, input_size), dtype=jnp.float32)
    w1, b1, w2, b2 = init_tower_params(k_p, input_size, output_size, hidden_size)

    # Pure-JAX reference (dropout in eval mode == identity).
    ref = jnp.maximum(x @ w1 + b1, 0.0) @ w2 + b2

    # Params are padded/cast ONCE outside the per-call path.
    params = prepare_tower_params(w1, b1, w2, b2)

    # f32 path, small batch (single grid step).
    out = tower_forward(x, *params)
    jax.block_until_ready(out)
    assert out.shape == (batch, output_size)
    assert jnp.allclose(out, ref, atol=1e-5, rtol=1e-5)

    # Larger batch with default block_b: auto-split into >=2 grid steps
    # (so v7x can shard the parallel batch axis across its two TensorCores).
    batch2 = 64
    x2 = jax.random.normal(jax.random.PRNGKey(1), (batch2, input_size),
                           dtype=jnp.float32)
    ref2 = jnp.maximum(x2 @ w1 + b1, 0.0) @ w2 + b2
    out2 = tower_forward(x2, *params)
    jax.block_until_ready(out2)
    assert out2.shape == (batch2, output_size)
    assert jnp.allclose(out2, ref2, atol=1e-5, rtol=1e-5)

    # Explicit multi-block grid path (4 grid steps).
    out3 = tower_forward(x2, *params, block_b=16)
    jax.block_until_ready(out3)
    assert jnp.allclose(out3, ref2, atol=1e-5, rtol=1e-5)

    # bf16 MXU weights: x stays f32 in HBM (cast in-register inside the kernel),
    # accumulation is f32 -- looser tolerance expected.
    params_bf16 = prepare_tower_params(w1, b1, w2, b2, use_bf16=True)
    out_bf16 = tower_forward(x, *params_bf16)
    jax.block_until_ready(out_bf16)
    assert float(jnp.max(jnp.abs(out_bf16.astype(jnp.float32) - ref))) < 5e-2

    print("KERNEL_OK")
</pallas_src>

<mosaic_0001>
module attributes {stable_mosaic.version = 11 : i64} {
  func.func @_tower_kernel(%arg0: i32, %arg1: memref<8x32xf32, #tpu.memory_space<vmem>>, %arg2: memref<32x128xf32, #tpu.memory_space<vmem>>, %arg3: memref<1x128xf32, #tpu.memory_space<vmem>>, %arg4: memref<128x4xf32, #tpu.memory_space<vmem>>, %arg5: memref<1x4xf32, #tpu.memory_space<vmem>>, %arg6: memref<8x4xf32, #tpu.memory_space<vmem>>) attributes {dimension_semantics = [#tpu.dimension_semantics<parallel>], iteration_bounds = array<i64: 1>, scalar_prefetch = 0 : i64, scratch_operands = 0 : i64, tpu.core_type = #tpu.core_type<tc>, window_params = [{transform_indices = @transform_0, window_bounds = array<i64: 8, 32>}, {pipeline_mode = #tpu.pipeline_mode<synchronous>, transform_indices = @transform_1, window_bounds = array<i64: 32, 128>}, {pipeline_mode = #tpu.pipeline_mode<synchronous>, transform_indices = @transform_2, window_bounds = array<i64: 1, 128>}, {pipeline_mode = #tpu.pipeline_mode<synchronous>, transform_indices = @transform_3, window_bounds = array<i64: 128, 4>}, {pipeline_mode = #tpu.pipeline_mode<synchronous>, transform_indices = @transform_4, window_bounds = array<i64: 1, 4>}, {transform_indices = @transform_5, window_bounds = array<i64: 8, 4>}]} {
    %c0 = arith.constant 0 : index
    %c0_0 = arith.constant 0 : index
    %0 = vector.load %arg1[%c0, %c0_0] : memref<8x32xf32, #tpu.memory_space<vmem>>, vector<8x32xf32>
    %c0_1 = arith.constant 0 : index
    %c0_2 = arith.constant 0 : index
    %1 = vector.load %arg2[%c0_1, %c0_2] : memref<32x128xf32, #tpu.memory_space<vmem>>, vector<32x128xf32>
    %cst = arith.constant dense<0.000000e+00> : vector<8x128xf32>
    %2 = tpu.matmul %0, %1, %cst {dimension_numbers = #tpu.dot_dimension_numbers<[1], [0], [0], [1], [0, 0, 1, 1], [], []>} : vector<8x32xf32>, vector<32x128xf32>, vector<8x128xf32> -> vector<8x128xf32>
    %c0_3 = arith.constant 0 : index
    %c0_4 = arith.constant 0 : index
    %3 = vector.load %arg3[%c0_3, %c0_4] : memref<1x128xf32, #tpu.memory_space<vmem>>, vector<1x128xf32>
    %4 = vector.broadcast %3 : vector<1x128xf32> to vector<8x128xf32>
    %5 = arith.addf %2, %4 : vector<8x128xf32>
    %cst_5 = arith.constant 0.000000e+00 : f32
    %6 = vector.broadcast %cst_5 : f32 to vector<8x128xf32>
    %7 = arith.maximumf %5, %6 : vector<8x128xf32>
    %c0_6 = arith.constant 0 : index
    %c0_7 = arith.constant 0 : index
    %8 = vector.load %arg4[%c0_6, %c0_7] : memref<128x4xf32, #tpu.memory_space<vmem>>, vector<128x4xf32>
    %cst_8 = arith.constant dense<0.000000e+00> : vector<8x4xf32>
    %9 = tpu.matmul %7, %8, %cst_8 {dimension_numbers = #tpu.dot_dimension_numbers<[1], [0], [0], [1], [0, 0, 1, 1], [], []>} : vector<8x128xf32>, vector<128x4xf32>, vector<8x4xf32> -> vector<8x4xf32>
    %c0_9 = arith.constant 0 : index
    %c0_10 = arith.constant 0 : index
    %10 = vector.load %arg5[%c0_9, %c0_10] : memref<1x4xf32, #tpu.memory_space<vmem>>, vector<1x4xf32>
    %11 = vector.broadcast %10 : vector<1x4xf32> to vector<8x4xf32>
    %12 = arith.addf %9, %11 : vector<8x4xf32>
    %c0_11 = arith.constant 0 : index
    %c0_12 = arith.constant 0 : index
    %13 = vector.load %arg6[%c0_11, %c0_12] : memref<8x4xf32, #tpu.memory_space<vmem>>, vector<8x4xf32>
    tpu.vector_store %arg6[%c0_11, %c0_12], %12 {strides = array<i32>} : memref<8x4xf32, #tpu.memory_space<vmem>>, vector<8x4xf32>,
    return
  }
  func.func @transform_0(%arg0: i32) -> (i32, i32) {
    %c0_i32 = arith.constant 0 : i32
    %c0_i32_0 = arith.constant 0 : i32
    return %arg0, %c0_i32 : i32, i32
  }
  func.func @transform_1(%arg0: i32) -> (i32, i32) {
    %c0_i32 = arith.constant 0 : i32
    %c0_i32_0 = arith.constant 0 : i32
    %c0_i32_1 = arith.constant 0 : i32
    return %c0_i32, %c0_i32_0 : i32, i32
  }
  func.func @transform_2(%arg0: i32) -> (i32, i32) {
    %c0_i32 = arith.constant 0 : i32
    %c0_i32_0 = arith.constant 0 : i32
    %c0_i32_1 = arith.constant 0 : i32
    return %c0_i32, %c0_i32_0 : i32, i32
  }
  func.func @transform_3(%arg0: i32) -> (i32, i32) {
    %c0_i32 = arith.constant 0 : i32
    %c0_i32_0 = arith.constant 0 : i32
    %c0_i32_1 = arith.constant 0 : i32
    return %c0_i32, %c0_i32_0 : i32, i32
  }
  func.func @transform_4(%arg0: i32) -> (i32, i32) {
    %c0_i32 = arith.constant 0 : i32
    %c0_i32_0 = arith.constant 0 : i32
    %c0_i32_1 = arith.constant 0 : i32
    return %c0_i32, %c0_i32_0 : i32, i32
  }
  func.func @transform_5(%arg0: i32) -> (i32, i32) {
    %c0_i32 = arith.constant 0 : i32
    %c0_i32_0 = arith.constant 0 : i32
    return %arg0, %c0_i32 : i32, i32
  }
}

</mosaic_0001>

<llo_original>
// kernel: tower_forward.1
$region0: #{tower_forward.1}
  #allocation0 [shape = 'u32[]', space=smem, size = 0x4, offset = 0x4, fixed_abs, tag = 'smem constant byte address 0x4 - core index']
  #allocation1 [shape = 'u32[72,128]{1,0:T(1,128)}', space=vmem, size = 0x9000, scoped, tag = 'internal scratch']
  %s0 = inlined_call_operand.vmem [shape: f32[8,32], index: 0, kind: input, shape index: {}]
  %s1 = inlined_call_operand.vmem [shape: f32[32,128], index: 1, kind: input, shape index: {}]
  %s2 = inlined_call_operand.vmem [shape: f32[1,128], index: 2, kind: input, shape index: {}]
  %s3 = inlined_call_operand.vmem [shape: f32[128,4], index: 3, kind: input, shape index: {}]
  %s4 = inlined_call_operand.vmem [shape: f32[1,4], index: 4, kind: input, shape index: {}]
  %s5 = inlined_call_operand.vmem [shape: f32[8,4], index: 5, kind: output, shape index: {}]
  %s6 = sld [smem:[#allocation0]]
  $region30: #{tower_forward.1} parent=0
    _
  %s8 = ssub.s32 1, %s6
  %s9 = scalar_select 0, %s8, %s6
  // Predicated region
  $region2: #{tower_forward.1} parent=0 // pred_check
    _
  $region3: #{tower_forward.1} parent=0 // pred_check_branch
    %11 = sbr.rel (0) target = $region5
  $region4: #{tower_forward.1} parent=0 // pred_region
    _
  $region5: #{tower_forward.1} parent=0 // pred_fallthru
    _
  // Predicated region
  $region6: #{tower_forward.1} parent=0 // pred_check
    _
  $region7: #{tower_forward.1} parent=0 // pred_check_branch
    %13 = sbr.rel (0) target = $region9
  $region8: #{tower_forward.1} parent=0 // pred_region
    _
  $region9: #{tower_forward.1} parent=0 // pred_fallthru
    _
  // Predicated region
  $region10: #{tower_forward.1} parent=0 // pred_check
    _
  $region11: #{tower_forward.1} parent=0 // pred_check_branch
    %15 = sbr.rel (0) target = $region13
  $region12: #{tower_forward.1} parent=0 // pred_region
    _
  $region13: #{tower_forward.1} parent=0 // pred_fallthru
    _
  // Predicated region
  $region14: #{tower_forward.1} parent=0 // pred_check
    _
  $region15: #{tower_forward.1} parent=0 // pred_check_branch
    %17 = sbr.rel (0) target = $region17
  $region16: #{tower_forward.1} parent=0 // pred_region
    _
  $region17: #{tower_forward.1} parent=0 // pred_fallthru
    _
  // Predicated region
  $region18: #{tower_forward.1} parent=0 // pred_check
    _
  $region19: #{tower_forward.1} parent=0 // pred_check_branch
    %19 = sbr.rel (0) target = $region21
  $region20: #{tower_forward.1} parent=0 // pred_region
    _
  $region21: #{tower_forward.1} parent=0 // pred_fallthru
    _
  %v20 = vld [vmem:[%s0] sm:$0xff]
  %v21 = vld [vmem:[%s1] sm:$0xff]
  %v22 = vld [vmem:[%s1 + $0x8] sm:$0xff]
  %v23 = vld [vmem:[%s1 + $0x10] sm:$0xff]
  %v24 = vld [vmem:[%s1 + $0x18] sm:$0xff]
  %v25 = vld [vmem:[%s2] sm:$0x1]
  %v27 = vperm.slane %v25, 0
  %vm29 = vcmask 261120
  %v31 = vsel %vm29, %v20, 0
  %33 = vmatpush.msra.mxu0 0.0
  %34 = vmatpush.msra.mxu0 0.0
  %35 = vmatpush.msra.mxu0 0.0
  %36 = vmatpush.msra.mxu0 0.0
  %37 = vmatpush.msra.mxu0 0.0
  %38 = vmatpush.msra.mxu0 0.0
  %39 = vmatpush.msra.mxu0 0.0
  %40 = vmatpush.msra.mxu0 0.0
  %41 = vmatpush.msra.mxu0 0.0
  %42 = vmatpush.msra.mxu0 0.0
  %43 = vmatpush.msra.mxu0 0.0
  %44 = vmatpush.msra.mxu0 0.0
  %45 = vmatpush.msra.mxu0 %v24
  %46 = vmatpush.msra.mxu0 %v23
  %47 = vmatpush.msra.mxu0 %v22
  %48 = vmatpush.msra.mxu0 %v21
  %49 = vmatmul.f32.gmra.mxu0 %v31
  %v50 = vpop.f32.mrf.mxu0
  %v51 = vadd.f32 %v27, %v50
  %52 = vdwg.mxu0
  %v53 = vmax.f32 %v51, 0.0
  %v54 = vld [vmem:[%s3] sm:$0xff]
  %v55 = vld [vmem:[%s3 + $0x8] sm:$0xff]
  %v56 = vld [vmem:[%s3 + $0x10] sm:$0xff]
  %v57 = vld [vmem:[%s3 + $0x18] sm:$0xff]
  %v58 = vld [vmem:[%s3 + $0x20] sm:$0xff]
  %v59 = vld [vmem:[%s3 + $0x28] sm:$0xff]
  %v60 = vld [vmem:[%s3 + $0x30] sm:$0xff]
  %v61 = vld [vmem:[%s3 + $0x38] sm:$0xff]
  %v62 = vld [vmem:[%s3 + $0x40] sm:$0xff]
  %v63 = vld [vmem:[%s3 + $0x48] sm:$0xff]
  %v64 = vld [vmem:[%s3 + $0x50] sm:$0xff]
  %v65 = vld [vmem:[%s3 + $0x58] sm:$0xff]
  %v66 = vld [vmem:[%s3 + $0x60] sm:$0xff]
  %v67 = vld [vmem:[%s3 + $0x68] sm:$0xff]
  %v68 = vld [vmem:[%s3 + $0x70] sm:$0xff]
  %v69 = vld [vmem:[%s3 + $0x78] sm:$0xff]
  %v70 = vld [vmem:[%s4] sm:$0x1]
  %v72 = vperm.slane %v70, 0
  %74 = vmatpush.msra.mxu0 %v69
  %75 = vmatpush.msra.mxu0 %v68
  %76 = vmatpush.msra.mxu0 %v67
  %77 = vmatpush.msra.mxu0 %v66
  %78 = vmatpush.msra.mxu0 %v65
  %79 = vmatpush.msra.mxu0 %v64
  %80 = vmatpush.msra.mxu0 %v63
  %81 = vmatpush.msra.mxu0 %v62
  %82 = vmatpush.msra.mxu0 %v61
  %83 = vmatpush.msra.mxu0 %v60
  %84 = vmatpush.msra.mxu0 %v59
  %85 = vmatpush.msra.mxu0 %v58
  %86 = vmatpush.msra.mxu0 %v57
  %87 = vmatpush.msra.mxu0 %v56
  %88 = vmatpush.msra.mxu0 %v55
  %89 = vmatpush.msra.mxu0 %v54
  %90 = vmatmul.f32.gmra.mxu0 %v53
  %v91 = vpop.f32.mrf.mxu0
  %v92 = vadd.f32 %v72, %v91
  %93 = vdwg.mxu0
  %vm94 = vcmask 31744
  %95 = vst.msk [vmem:[%s5] sm:$0xff] %vm94, %v92
  // Predicated region
  $region22: #{tower_forward.1} parent=0 // pred_check
    _
  $region23: #{tower_forward.1} parent=0 // pred_check_branch
    %97 = sbr.rel (0) target = $region25
  $region24: #{tower_forward.1} parent=0 // pred_region
    _
  $region25: #{tower_forward.1} parent=0 // pred_fallthru
    _
  // Predicated region
  $region26: #{tower_forward.1} parent=0 // pred_check
    _
  $region27: #{tower_forward.1} parent=0 // pred_check_branch
    %99 = sbr.rel (0) target = $region29
  $region28: #{tower_forward.1} parent=0 // pred_region
    _
  $region29: #{tower_forward.1} parent=0 // pred_fallthru
    _

</llo_original>
